<compile_context>
chip_gen: v5e
topology: v5e:2x2
jax: 0.10.0
libtpu: 0.0.40
codegen_flags: <defaults>
</compile_context>

<pallas_src>
import math
import functools

import jax
import jax.numpy as jnp
from jax import lax
from jax.experimental import pallas as pl
from jax.experimental.pallas import tpu as pltpu

LN_EPS = 1e-5                       # torch.nn.LayerNorm default
_GELU_C = math.sqrt(2.0 / math.pi)  # NewGELU constant


# ----------------------------- kernels ------------------------------------ #

def _router_kernel(x_ref, rw_ref, rb_ref, r_ref):
    """Block.router scores on the raw x (flattened (rows, D) view).

    Output is (rows, 1); the store volume is only B*L floats so the lane-1
    layout is deliberately kept (negligible vs. the (B,L,D) tensors).
    """
    x = x_ref[...]                                                  # (n, D) f32
    r_ref[...] = jnp.sum(x * rw_ref[...], axis=-1, keepdims=True) + rb_ref[...]


def _tail_kernel(x_ref, mask_ref, pflip_ref, g1_ref, b1_ref, g2_ref, b2_ref,
                 wfc_ref, bfc_ref, wp_ref, bp_ref, out_ref):
    """Fused tail: recompute ln_1 in-register, add the masked seq-flipped
    attention contribution, then ln_2 + MLP (c_fc -> NewGELU -> c_proj) with
    bf16 MXU matmuls (f32 accumulation) and the second residual."""
    x = x_ref[...]                                                  # (n, D) f32

    # ln_1(x) recomputed in-kernel (saves the HBM round trip of ln1 and its
    # flipped copy that the previous version materialized).
    mu1 = jnp.mean(x, axis=-1, keepdims=True)
    var1 = jnp.mean(jnp.square(x - mu1), axis=-1, keepdims=True)
    ln1 = (x - mu1) * lax.rsqrt(var1 + LN_EPS) * g1_ref[...] + b1_ref[...]

    # Attention contribution that survives in the reference:
    #   top-k row p receives ln_1(x)[L-1-p]; other rows receive 0.
    # The within-batch sequence flip is a constant block-diagonal anti-identity
    # permutation applied on the (otherwise idle) MXU -- exact for f32 inputs,
    # and avoids any lax.rev / negative-stride op inside the kernel.
    ln1_flip = jnp.dot(pflip_ref[...], ln1, preferred_element_type=jnp.float32)
    x1 = x + mask_ref[...] * ln1_flip                               # residual 1

    # ln_2
    mu2 = jnp.mean(x1, axis=-1, keepdims=True)
    var2 = jnp.mean(jnp.square(x1 - mu2), axis=-1, keepdims=True)
    ln2 = (x1 - mu2) * lax.rsqrt(var2 + LN_EPS) * g2_ref[...] + b2_ref[...]

    # MLP: bf16 operands on the MXU, f32 accumulation.  LayerNorm / GELU math
    # stays in f32 (v5e has no bf16 VPU/EUP).
    h = jnp.dot(ln2.astype(jnp.bfloat16), wfc_ref[...],
                preferred_element_type=jnp.float32) + bfc_ref[...]
    act = 0.5 * h * (1.0 + jnp.tanh(_GELU_C * (h + 0.044715 * (h * h * h))))
    mlp = jnp.dot(act.astype(jnp.bfloat16), wp_ref[...],
                  preferred_element_type=jnp.float32) + bp_ref[...]

    # Dropout(resid_pdrop) applied as identity (eval-mode semantics).
    out_ref[...] = x1 + mlp                                         # residual 2


# ------------------------------ wrapper ------------------------------------ #

def init_params(key, dim, inner_dim):
    ks = jax.random.split(key, 6)
    p = {}
    p["router_w"] = jax.random.normal(ks[0], (1, dim), jnp.float32) * 0.02
    p["router_b"] = jnp.zeros((1, 1), jnp.float32)
    p["ln1_g"] = jnp.ones((1, dim), jnp.float32)
    p["ln1_b"] = jnp.zeros((1, dim), jnp.float32)
    p["ln2_g"] = jnp.ones((1, dim), jnp.float32)
    p["ln2_b"] = jnp.zeros((1, dim), jnp.float32)
    # to_q / to_k / to_v / to_out / attn.router exist in the module but only
    # feed the reference's dead s_output branch (overwritten before return);
    # they are kept for parity and never used in the forward output.
    p["w_q"] = jax.random.normal(ks[1], (inner_dim, dim), jnp.float32) * 0.02
    p["w_k"] = jax.random.normal(ks[2], (inner_dim, dim), jnp.float32) * 0.02
    p["w_v"] = jax.random.normal(ks[3], (inner_dim, dim), jnp.float32) * 0.02
    # MLP weights stored bf16 so HBM->VMEM DMA bytes are halved and the MXU
    # runs at its bf16-native rate on all generations; biases stay f32.
    p["w_fc"] = (jax.random.normal(ks[4], (dim, 4 * dim), jnp.float32)
                 * 0.02).astype(jnp.bfloat16)
    p["b_fc"] = jnp.zeros((1, 4 * dim), jnp.float32)
    p["w_proj"] = (jax.random.normal(ks[5], (4 * dim, dim), jnp.float32)
                   * 0.02).astype(jnp.bfloat16)
    p["b_proj"] = jnp.zeros((1, dim), jnp.float32)
    return p


def _pick_batch_block(b, l, target_rows=256):
    """Batch items per grid step: aim for >=128-256 rows per MXU call while
    keeping the block an exact divisor of the batch (amortizes the ~0.35us
    per-grid-step overhead).  Falls back to the full batch if the resulting
    sublane count would violate the (8,128) block constraint."""
    bb = max(1, min(b, max(1, target_rows // max(l, 1))))
    while b % bb:
        bb -= 1
    if (bb * l) % 8 != 0:
        bb = b          # block == full array -> exempt from the (8,128) rule
    return bb


def block_forward(x, params, capacity):
    b, l, d = x.shape
    router_k = math.ceil(l * capacity)
    bb = _pick_batch_block(b, l)
    n = bb * l                       # rows per grid step
    grid = (b // bb,)
    # NOTE(perf/v7x): with a tiny demo batch the grid may collapse to 1 step;
    # at production shapes keep >=2 parallel steps so both TensorCores work.
    x2 = x.reshape(b * l, d)         # lane-dense (rows, D) view (free reshape)

    cparams = pltpu.CompilerParams(
        dimension_semantics=("parallel",),
        vmem_limit_bytes=32 * 1024 * 1024,
    )
    # TODO(synk): for production d (e.g. 2048+) tile the 4*d FFN dim with an
    # f32 VMEM accumulator (and/or single-buffer the grid-invariant weights)
    # so W_fc/W_proj fit v7x's 64 MiB VMEM; also pad D to a multiple of 128.

    # ---- kernel 1: router scores on raw x -------------------------------- #
    scores = pl.pallas_call(
        _router_kernel,
        out_shape=jax.ShapeDtypeStruct((b * l, 1), jnp.float32),
        grid=grid,
        in_specs=[
            pl.BlockSpec((n, d), lambda i: (i, 0)),
            pl.BlockSpec((1, d), lambda i: (0, 0)),
            pl.BlockSpec((1, 1), lambda i: (0, 0)),
        ],
        out_specs=pl.BlockSpec((n, 1), lambda i: (i, 0)),
        compiler_params=cparams,
    )(x2, params["router_w"], params["router_b"])

    router_w = scores.reshape(b, l)

    # ---- data-dependent top-k selection (plain JAX glue) ------------------ #
    # Exactly-k selection built from topk_index itself (matches the reference's
    # `output[i, topk_index[i], :] = ...` even when router scores tie).
    _, topk_index = lax.top_k(router_w, router_k)
    mask = jnp.zeros((b, l), jnp.float32).at[
        jnp.arange(b)[:, None], topk_index].set(1.0)
    mask2 = mask.reshape(b * l, 1)

    # Constant within-batch sequence-flip permutation for one (bb*l)-row block:
    # block-diagonal of bb anti-identity (l, l) blocks.
    pflip = jnp.kron(jnp.eye(bb, dtype=jnp.float32),
                     jnp.eye(l, dtype=jnp.float32)[::-1])            # (n, n)

    # ---- kernel 2: fused tail --------------------------------------------- #
    out2 = pl.pallas_call(
        _tail_kernel,
        out_shape=jax.ShapeDtypeStruct((b * l, d), jnp.float32),
        grid=grid,
        in_specs=[
            pl.BlockSpec((n, d), lambda i: (i, 0)),        # x (raw)
            pl.BlockSpec((n, 1), lambda i: (i, 0)),        # top-k mask
            pl.BlockSpec((n, n), lambda i: (0, 0)),        # flip permutation
            pl.BlockSpec((1, d), lambda i: (0, 0)),        # ln1 gamma
            pl.BlockSpec((1, d), lambda i: (0, 0)),        # ln1 beta
            pl.BlockSpec((1, d), lambda i: (0, 0)),        # ln2 gamma
            pl.BlockSpec((1, d), lambda i: (0, 0)),        # ln2 beta
            pl.BlockSpec((d, 4 * d), lambda i: (0, 0)),    # W_fc   (bf16)
            pl.BlockSpec((1, 4 * d), lambda i: (0, 0)),    # b_fc
            pl.BlockSpec((4 * d, d), lambda i: (0, 0)),    # W_proj (bf16)
            pl.BlockSpec((1, d), lambda i: (0, 0)),        # b_proj
        ],
        out_specs=pl.BlockSpec((n, d), lambda i: (i, 0)),
        compiler_params=cparams,
    )(x2, mask2, pflip,
      params["ln1_g"], params["ln1_b"], params["ln2_g"], params["ln2_b"],
      params["w_fc"], params["b_fc"], params["w_proj"], params["b_proj"])

    return out2.reshape(b, l, d)


if __name__ == "__main__":
    key = jax.random.PRNGKey(0)
    B, L, D = 2, 8, 32
    INNER = 16          # attn inner_dim; only feeds the reference's dead branch
    CAPACITY = 0.5      # router_k = ceil(8 * 0.5) = 4

    kx, kp = jax.random.split(key)
    x = jax.random.normal(kx, (B, L, D), jnp.float32)
    params = init_params(kp, D, INNER)

    fwd = jax.jit(functools.partial(block_forward, capacity=CAPACITY))
    out = fwd(x, params)
    jax.block_until_ready(out)
    assert out.shape == (B, L, D) and out.dtype == jnp.float32
    print("KERNEL_OK")
</pallas_src>

<mosaic_0001>
module attributes {stable_mosaic.version = 11 : i64} {
  func.func @_router_kernel(%arg0: i32, %arg1: memref<16x32xf32, #tpu.memory_space<vmem>>, %arg2: memref<1x32xf32, #tpu.memory_space<vmem>>, %arg3: memref<1x1xf32, #tpu.memory_space<vmem>>, %arg4: memref<16x1xf32, #tpu.memory_space<vmem>>) attributes {dimension_semantics = [#tpu.dimension_semantics<parallel>], iteration_bounds = array<i64: 1>, scalar_prefetch = 0 : i64, scratch_operands = 0 : i64, tpu.core_type = #tpu.core_type<tc>, window_params = [{transform_indices = @transform_0, window_bounds = array<i64: 16, 32>}, {pipeline_mode = #tpu.pipeline_mode<synchronous>, transform_indices = @transform_1, window_bounds = array<i64: 1, 32>}, {pipeline_mode = #tpu.pipeline_mode<synchronous>, transform_indices = @transform_2, window_bounds = array<i64: 1, 1>}, {transform_indices = @transform_3, window_bounds = array<i64: 16, 1>}]} {
    %c0 = arith.constant 0 : index
    %c0_0 = arith.constant 0 : index
    %0 = vector.load %arg1[%c0, %c0_0] : memref<16x32xf32, #tpu.memory_space<vmem>>, vector<16x32xf32>
    %c0_1 = arith.constant 0 : index
    %c0_2 = arith.constant 0 : index
    %1 = vector.load %arg2[%c0_1, %c0_2] : memref<1x32xf32, #tpu.memory_space<vmem>>, vector<1x32xf32>
    %2 = vector.broadcast %1 : vector<1x32xf32> to vector<16x32xf32>
    %3 = arith.mulf %0, %2 : vector<16x32xf32>
    %cst = arith.constant dense<0.000000e+00> : vector<16xf32>
    %4 = vector.multi_reduction <add>, %3, %cst [1] : vector<16x32xf32> to vector<16xf32>
    %5 = vector.shape_cast %4 : vector<16xf32> to vector<16x1xf32>
    %c0_3 = arith.constant 0 : index
    %c0_4 = arith.constant 0 : index
    %6 = vector.load %arg3[%c0_3, %c0_4] : memref<1x1xf32, #tpu.memory_space<vmem>>, vector<1x1xf32>
    %7 = vector.broadcast %6 : vector<1x1xf32> to vector<16x1xf32>
    %8 = arith.addf %5, %7 : vector<16x1xf32>
    %c0_5 = arith.constant 0 : index
    %c0_6 = arith.constant 0 : index
    %9 = vector.load %arg4[%c0_5, %c0_6] : memref<16x1xf32, #tpu.memory_space<vmem>>, vector<16x1xf32>
    tpu.vector_store %arg4[%c0_5, %c0_6], %8 {strides = array<i32>} : memref<16x1xf32, #tpu.memory_space<vmem>>, vector<16x1xf32>,
    return
  }
  func.func @transform_0(%arg0: i32) -> (i32, i32) {
    %c0_i32 = arith.constant 0 : i32
    %c0_i32_0 = arith.constant 0 : i32
    return %arg0, %c0_i32 : i32, i32
  }
  func.func @transform_1(%arg0: i32) -> (i32, i32) {
    %c0_i32 = arith.constant 0 : i32
    %c0_i32_0 = arith.constant 0 : i32
    %c0_i32_1 = arith.constant 0 : i32
    return %c0_i32, %c0_i32_0 : i32, i32
  }
  func.func @transform_2(%arg0: i32) -> (i32, i32) {
    %c0_i32 = arith.constant 0 : i32
    %c0_i32_0 = arith.constant 0 : i32
    %c0_i32_1 = arith.constant 0 : i32
    return %c0_i32, %c0_i32_0 : i32, i32
  }
  func.func @transform_3(%arg0: i32) -> (i32, i32) {
    %c0_i32 = arith.constant 0 : i32
    %c0_i32_0 = arith.constant 0 : i32
    return %arg0, %c0_i32 : i32, i32
  }
}

module attributes {stable_mosaic.version = 11 : i64} {
  func.func @_tail_kernel(%arg0: i32, %arg1: memref<16x32xf32, #tpu.memory_space<vmem>>, %arg2: memref<16x1xf32, #tpu.memory_space<vmem>>, %arg3: memref<16x16xf32, #tpu.memory_space<vmem>>, %arg4: memref<1x32xf32, #tpu.memory_space<vmem>>, %arg5: memref<1x32xf32, #tpu.memory_space<vmem>>, %arg6: memref<1x32xf32, #tpu.memory_space<vmem>>, %arg7: memref<1x32xf32, #tpu.memory_space<vmem>>, %arg8: memref<32x128xbf16, #tpu.memory_space<vmem>>, %arg9: memref<1x128xf32, #tpu.memory_space<vmem>>, %arg10: memref<128x32xbf16, #tpu.memory_space<vmem>>, %arg11: memref<1x32xf32, #tpu.memory_space<vmem>>, %arg12: memref<16x32xf32, #tpu.memory_space<vmem>>) attributes {dimension_semantics = [#tpu.dimension_semantics<parallel>], iteration_bounds = array<i64: 1>, scalar_prefetch = 0 : i64, scratch_operands = 0 : i64, tpu.core_type = #tpu.core_type<tc>, window_params = [{transform_indices = @transform_0, window_bounds = array<i64: 16, 32>}, {transform_indices = @transform_1, window_bounds = array<i64: 16, 1>}, {pipeline_mode = #tpu.pipeline_mode<synchronous>, transform_indices = @transform_2, window_bounds = array<i64: 16, 16>}, {pipeline_mode = #tpu.pipeline_mode<synchronous>, transform_indices = @transform_3, window_bounds = array<i64: 1, 32>}, {pipeline_mode = #tpu.pipeline_mode<synchronous>, transform_indices = @transform_4, window_bounds = array<i64: 1, 32>}, {pipeline_mode = #tpu.pipeline_mode<synchronous>, transform_indices = @transform_5, window_bounds = array<i64: 1, 32>}, {pipeline_mode = #tpu.pipeline_mode<synchronous>, transform_indices = @transform_6, window_bounds = array<i64: 1, 32>}, {pipeline_mode = #tpu.pipeline_mode<synchronous>, transform_indices = @transform_7, window_bounds = array<i64: 32, 128>}, {pipeline_mode = #tpu.pipeline_mode<synchronous>, transform_indices = @transform_8, window_bounds = array<i64: 1, 128>}, {pipeline_mode = #tpu.pipeline_mode<synchronous>, transform_indices = @transform_9, window_bounds = array<i64: 128, 32>}, {pipeline_mode = #tpu.pipeline_mode<synchronous>, transform_indices = @transform_10, window_bounds = array<i64: 1, 32>}, {transform_indices = @transform_11, window_bounds = array<i64: 16, 32>}]} {
    %c0 = arith.constant 0 : index
    %c0_0 = arith.constant 0 : index
    %0 = vector.load %arg1[%c0, %c0_0] : memref<16x32xf32, #tpu.memory_space<vmem>>, vector<16x32xf32>
    %cst = arith.constant dense<0.000000e+00> : vector<16xf32>
    %1 = vector.multi_reduction <add>, %0, %cst [1] : vector<16x32xf32> to vector<16xf32>
    %2 = vector.shape_cast %1 : vector<16xf32> to vector<16x1xf32>
    %cst_1 = arith.constant 3.200000e+01 : f32
    %3 = vector.broadcast %cst_1 : f32 to vector<16x1xf32>
    %4 = arith.divf %2, %3 : vector<16x1xf32>
    %5 = vector.broadcast %4 : vector<16x1xf32> to vector<16x32xf32>
    %6 = arith.subf %0, %5 : vector<16x32xf32>
    %7 = arith.mulf %6, %6 : vector<16x32xf32>
    %cst_2 = arith.constant dense<0.000000e+00> : vector<16xf32>
    %8 = vector.multi_reduction <add>, %7, %cst_2 [1] : vector<16x32xf32> to vector<16xf32>
    %9 = vector.shape_cast %8 : vector<16xf32> to vector<16x1xf32>
    %cst_3 = arith.constant 3.200000e+01 : f32
    %10 = vector.broadcast %cst_3 : f32 to vector<16x1xf32>
    %11 = arith.divf %9, %10 : vector<16x1xf32>
    %12 = vector.broadcast %4 : vector<16x1xf32> to vector<16x32xf32>
    %13 = arith.subf %0, %12 : vector<16x32xf32>
    %cst_4 = arith.constant 9.99999974E-6 : f32
    %14 = vector.broadcast %cst_4 : f32 to vector<16x1xf32>
    %15 = arith.addf %11, %14 : vector<16x1xf32>
    %16 = math.rsqrt %15 : vector<16x1xf32>
    %17 = vector.broadcast %16 : vector<16x1xf32> to vector<16x32xf32>
    %18 = arith.mulf %13, %17 : vector<16x32xf32>
    %c0_5 = arith.constant 0 : index
    %c0_6 = arith.constant 0 : index
    %19 = vector.load %arg4[%c0_5, %c0_6] : memref<1x32xf32, #tpu.memory_space<vmem>>, vector<1x32xf32>
    %20 = vector.broadcast %19 : vector<1x32xf32> to vector<16x32xf32>
    %21 = arith.mulf %18, %20 : vector<16x32xf32>
    %c0_7 = arith.constant 0 : index
    %c0_8 = arith.constant 0 : index
    %22 = vector.load %arg5[%c0_7, %c0_8] : memref<1x32xf32, #tpu.memory_space<vmem>>, vector<1x32xf32>
    %23 = vector.broadcast %22 : vector<1x32xf32> to vector<16x32xf32>
    %24 = arith.addf %21, %23 : vector<16x32xf32>
    %c0_9 = arith.constant 0 : index
    %c0_10 = arith.constant 0 : index
    %25 = vector.load %arg3[%c0_9, %c0_10] : memref<16x16xf32, #tpu.memory_space<vmem>>, vector<16x16xf32>
    %cst_11 = arith.constant dense<0.000000e+00> : vector<16x32xf32>
    %26 = tpu.matmul %25, %24, %cst_11 {dimension_numbers = #tpu.dot_dimension_numbers<[1], [0], [0], [1], [0, 0, 1, 1], [], []>} : vector<16x16xf32>, vector<16x32xf32>, vector<16x32xf32> -> vector<16x32xf32>
    %c0_12 = arith.constant 0 : index
    %c0_13 = arith.constant 0 : index
    %27 = vector.load %arg2[%c0_12, %c0_13] : memref<16x1xf32, #tpu.memory_space<vmem>>, vector<16x1xf32>
    %28 = vector.broadcast %27 : vector<16x1xf32> to vector<16x32xf32>
    %29 = arith.mulf %28, %26 : vector<16x32xf32>
    %30 = arith.addf %0, %29 : vector<16x32xf32>
    %cst_14 = arith.constant dense<0.000000e+00> : vector<16xf32>
    %31 = vector.multi_reduction <add>, %30, %cst_14 [1] : vector<16x32xf32> to vector<16xf32>
    %32 = vector.shape_cast %31 : vector<16xf32> to vector<16x1xf32>
    %cst_15 = arith.constant 3.200000e+01 : f32
    %33 = vector.broadcast %cst_15 : f32 to vector<16x1xf32>
    %34 = arith.divf %32, %33 : vector<16x1xf32>
    %35 = vector.broadcast %34 : vector<16x1xf32> to vector<16x32xf32>
    %36 = arith.subf %30, %35 : vector<16x32xf32>
    %37 = arith.mulf %36, %36 : vector<16x32xf32>
    %cst_16 = arith.constant dense<0.000000e+00> : vector<16xf32>
    %38 = vector.multi_reduction <add>, %37, %cst_16 [1] : vector<16x32xf32> to vector<16xf32>
    %39 = vector.shape_cast %38 : vector<16xf32> to vector<16x1xf32>
    %cst_17 = arith.constant 3.200000e+01 : f32
    %40 = vector.broadcast %cst_17 : f32 to vector<16x1xf32>
    %41 = arith.divf %39, %40 : vector<16x1xf32>
    %42 = vector.broadcast %34 : vector<16x1xf32> to vector<16x32xf32>
    %43 = arith.subf %30, %42 : vector<16x32xf32>
    %cst_18 = arith.constant 9.99999974E-6 : f32
    %44 = vector.broadcast %cst_18 : f32 to vector<16x1xf32>
    %45 = arith.addf %41, %44 : vector<16x1xf32>
    %46 = math.rsqrt %45 : vector<16x1xf32>
    %47 = vector.broadcast %46 : vector<16x1xf32> to vector<16x32xf32>
    %48 = arith.mulf %43, %47 : vector<16x32xf32>
    %c0_19 = arith.constant 0 : index
    %c0_20 = arith.constant 0 : index
    %49 = vector.load %arg6[%c0_19, %c0_20] : memref<1x32xf32, #tpu.memory_space<vmem>>, vector<1x32xf32>
    %50 = vector.broadcast %49 : vector<1x32xf32> to vector<16x32xf32>
    %51 = arith.mulf %48, %50 : vector<16x32xf32>
    %c0_21 = arith.constant 0 : index
    %c0_22 = arith.constant 0 : index
    %52 = vector.load %arg7[%c0_21, %c0_22] : memref<1x32xf32, #tpu.memory_space<vmem>>, vector<1x32xf32>
    %53 = vector.broadcast %52 : vector<1x32xf32> to vector<16x32xf32>
    %54 = arith.addf %51, %53 : vector<16x32xf32>
    %55 = arith.truncf %54 : vector<16x32xf32> to vector<16x32xbf16>
    %c0_23 = arith.constant 0 : index
    %c0_24 = arith.constant 0 : index
    %56 = vector.load %arg8[%c0_23, %c0_24] : memref<32x128xbf16, #tpu.memory_space<vmem>>, vector<32x128xbf16>
    %cst_25 = arith.constant dense<0.000000e+00> : vector<16x128xf32>
    %57 = tpu.matmul %55, %56, %cst_25 {dimension_numbers = #tpu.dot_dimension_numbers<[1], [0], [0], [1], [0, 0, 1, 1], [], []>} : vector<16x32xbf16>, vector<32x128xbf16>, vector<16x128xf32> -> vector<16x128xf32>
    %c0_26 = arith.constant 0 : index
    %c0_27 = arith.constant 0 : index
    %58 = vector.load %arg9[%c0_26, %c0_27] : memref<1x128xf32, #tpu.memory_space<vmem>>, vector<1x128xf32>
    %59 = vector.broadcast %58 : vector<1x128xf32> to vector<16x128xf32>
    %60 = arith.addf %57, %59 : vector<16x128xf32>
    %cst_28 = arith.constant 5.000000e-01 : f32
    %61 = vector.broadcast %cst_28 : f32 to vector<16x128xf32>
    %62 = arith.mulf %61, %60 : vector<16x128xf32>
    %63 = arith.mulf %60, %60 : vector<16x128xf32>
    %64 = arith.mulf %63, %60 : vector<16x128xf32>
    %cst_29 = arith.constant 4.471500e-02 : f32
    %65 = vector.broadcast %cst_29 : f32 to vector<16x128xf32>
    %66 = arith.mulf %65, %64 : vector<16x128xf32>
    %67 = arith.addf %60, %66 : vector<16x128xf32>
    %cst_30 = arith.constant 0.797884583 : f32
    %68 = vector.broadcast %cst_30 : f32 to vector<16x128xf32>
    %69 = arith.mulf %68, %67 : vector<16x128xf32>
    %70 = math.tanh %69 : vector<16x128xf32>
    %cst_31 = arith.constant 1.000000e+00 : f32
    %71 = vector.broadcast %cst_31 : f32 to vector<16x128xf32>
    %72 = arith.addf %71, %70 : vector<16x128xf32>
    %73 = arith.mulf %62, %72 : vector<16x128xf32>
    %74 = arith.truncf %73 : vector<16x128xf32> to vector<16x128xbf16>
    %c0_32 = arith.constant 0 : index
    %c0_33 = arith.constant 0 : index
    %75 = vector.load %arg10[%c0_32, %c0_33] : memref<128x32xbf16, #tpu.memory_space<vmem>>, vector<128x32xbf16>
    %cst_34 = arith.constant dense<0.000000e+00> : vector<16x32xf32>
    %76 = tpu.matmul %74, %75, %cst_34 {dimension_numbers = #tpu.dot_dimension_numbers<[1], [0], [0], [1], [0, 0, 1, 1], [], []>} : vector<16x128xbf16>, vector<128x32xbf16>, vector<16x32xf32> -> vector<16x32xf32>
    %c0_35 = arith.constant 0 : index
    %c0_36 = arith.constant 0 : index
    %77 = vector.load %arg11[%c0_35, %c0_36] : memref<1x32xf32, #tpu.memory_space<vmem>>, vector<1x32xf32>
    %78 = vector.broadcast %77 : vector<1x32xf32> to vector<16x32xf32>
    %79 = arith.addf %76, %78 : vector<16x32xf32>
    %80 = arith.addf %30, %79 : vector<16x32xf32>
    %c0_37 = arith.constant 0 : index
    %c0_38 = arith.constant 0 : index
    %81 = vector.load %arg12[%c0_37, %c0_38] : memref<16x32xf32, #tpu.memory_space<vmem>>, vector<16x32xf32>
    tpu.vector_store %arg12[%c0_37, %c0_38], %80 {strides = array<i32>} : memref<16x32xf32, #tpu.memory_space<vmem>>, vector<16x32xf32>,
    return
  }
  func.func @transform_0(%arg0: i32) -> (i32, i32) {
    %c0_i32 = arith.constant 0 : i32
    %c0_i32_0 = arith.constant 0 : i32
    return %arg0, %c0_i32 : i32, i32
  }
  func.func @transform_1(%arg0: i32) -> (i32, i32) {
    %c0_i32 = arith.constant 0 : i32
    %c0_i32_0 = arith.constant 0 : i32
    return %arg0, %c0_i32 : i32, i32
  }
  func.func @transform_2(%arg0: i32) -> (i32, i32) {
    %c0_i32 = arith.constant 0 : i32
    %c0_i32_0 = arith.constant 0 : i32
    %c0_i32_1 = arith.constant 0 : i32
    return %c0_i32, %c0_i32_0 : i32, i32
  }
  func.func @transform_3(%arg0: i32) -> (i32, i32) {
    %c0_i32 = arith.constant 0 : i32
    %c0_i32_0 = arith.constant 0 : i32
    %c0_i32_1 = arith.constant 0 : i32
    return %c0_i32, %c0_i32_0 : i32, i32
  }
  func.func @transform_4(%arg0: i32) -> (i32, i32) {
    %c0_i32 = arith.constant 0 : i32
    %c0_i32_0 = arith.constant 0 : i32
    %c0_i32_1 = arith.constant 0 : i32
    return %c0_i32, %c0_i32_0 : i32, i32
  }
  func.func @transform_5(%arg0: i32) -> (i32, i32) {
    %c0_i32 = arith.constant 0 : i32
    %c0_i32_0 = arith.constant 0 : i32
    %c0_i32_1 = arith.constant 0 : i32
    return %c0_i32, %c0_i32_0 : i32, i32
  }
  func.func @transform_6(%arg0: i32) -> (i32, i32) {
    %c0_i32 = arith.constant 0 : i32
    %c0_i32_0 = arith.constant 0 : i32
    %c0_i32_1 = arith.constant 0 : i32
    return %c0_i32, %c0_i32_0 : i32, i32
  }
  func.func @transform_7(%arg0: i32) -> (i32, i32) {
    %c0_i32 = arith.constant 0 : i32
    %c0_i32_0 = arith.constant 0 : i32
    %c0_i32_1 = arith.constant 0 : i32
    return %c0_i32, %c0_i32_0 : i32, i32
  }
  func.func @transform_8(%arg0: i32) -> (i32, i32) {
    %c0_i32 = arith.constant 0 : i32
    %c0_i32_0 = arith.constant 0 : i32
    %c0_i32_1 = arith.constant 0 : i32
    return %c0_i32, %c0_i32_0 : i32, i32
  }
  func.func @transform_9(%arg0: i32) -> (i32, i32) {
    %c0_i32 = arith.constant 0 : i32
    %c0_i32_0 = arith.constant 0 : i32
    %c0_i32_1 = arith.constant 0 : i32
    return %c0_i32, %c0_i32_0 : i32, i32
  }
  func.func @transform_10(%arg0: i32) -> (i32, i32) {
    %c0_i32 = arith.constant 0 : i32
    %c0_i32_0 = arith.constant 0 : i32
    %c0_i32_1 = arith.constant 0 : i32
    return %c0_i32, %c0_i32_0 : i32, i32
  }
  func.func @transform_11(%arg0: i32) -> (i32, i32) {
    %c0_i32 = arith.constant 0 : i32
    %c0_i32_0 = arith.constant 0 : i32
    return %arg0, %c0_i32 : i32, i32
  }
}

</mosaic_0001>

<llo_original>
// kernel: block_forward.2
$region0: #{block_forward.2}
  #allocation0 [shape = 'u32[]', space=smem, size = 0x4, offset = 0x4, fixed_abs, tag = 'smem constant byte address 0x4 - core index']
  #allocation1 [shape = 'u32[72,128]{1,0:T(1,128)}', space=vmem, size = 0x9000, scoped, tag = 'internal scratch']
  #allocation2 [shape = 'f32[1,1]{1,0:T(1,128)S(1)}', space=vmem, size = 0x200, scoped, tag = 'scoped memory for block_forward.2']
  %s0 = inlined_call_operand.vmem [shape: f32[16,32], index: 0, kind: input, shape index: {}]
  %s1 = inlined_call_operand.vmem [shape: f32[1,32], index: 1, kind: input, shape index: {}]
  %s2 = inlined_call_operand.<no memory space> [shape: f32[1,1], index: 2, kind: input, shape index: {}]
  %s3 = inlined_call_operand.vmem [shape: f32[16,1], index: 3, kind: output, shape index: {}]
  %s4 = sld [smem:[#allocation0]]
  $region22: #{block_forward.2} parent=0
    _
  %s6 = ssub.s32 1, %s4
  %s7 = scalar_select 0, %s6, %s4
  %v8 = vstv %s2
  %9 = vst [vmem:[#allocation2] sm:$0x1] %v8
  // Predicated region
  $region2: #{block_forward.2} parent=0 // pred_check
    _
  $region3: #{block_forward.2} parent=0 // pred_check_branch
    %11 = sbr.rel (0) target = $region5
  $region4: #{block_forward.2} parent=0 // pred_region
    _
  $region5: #{block_forward.2} parent=0 // pred_fallthru
    _
  // Predicated region
  $region6: #{block_forward.2} parent=0 // pred_check
    _
  $region7: #{block_forward.2} parent=0 // pred_check_branch
    %13 = sbr.rel (0) target = $region9
  $region8: #{block_forward.2} parent=0 // pred_region
    _
  $region9: #{block_forward.2} parent=0 // pred_fallthru
    _
  // Predicated region
  $region10: #{block_forward.2} parent=0 // pred_check
    _
  $region11: #{block_forward.2} parent=0 // pred_check_branch
    %15 = sbr.rel (0) target = $region13
  $region12: #{block_forward.2} parent=0 // pred_region
    _
  $region13: #{block_forward.2} parent=0 // pred_fallthru
    _
  %v16 = vld [vmem:[%s0] sm:$0xff]
  %v17 = vld [vmem:[%s0 + $0x8] sm:$0xff]
  %v18 = vld [vmem:[%s1] sm:$0x1]
  %v20 = vperm.slane %v18, 0
  %v22 = vmul.f32 %v16, %v20
  %v23 = vmul.f32 %v17, %v20
  %vm24 = vcmask 261120
  %v25 = vsel %vm24, %v22, 0.0
  %26 = vadd.xlane.f32.xlu0 %v25
  %v27 = vpop.xlane.xlu0 %26
  %v28 = vsel %vm24, %v23, 0.0
  %29 = vadd.xlane.f32.xlu0 %v28
  %v30 = vpop.xlane.xlu0 %29
  %v31 = vld [vmem:[#allocation2] sm:$0x1]
  %v33 = vperm.slane %v31, 0
  %v35 = vadd.f32 %v27, %v33
  %v36 = vadd.f32 %v30, %v33
  %vm37 = vcmask 7168
  %38 = vst.msk [vmem:[%s3] sm:$0xff] %vm37, %v35
  %39 = vst.msk [vmem:[%s3 + $0x8] sm:$0xff] %vm37, %v36
  // Predicated region
  $region14: #{block_forward.2} parent=0 // pred_check
    _
  $region15: #{block_forward.2} parent=0 // pred_check_branch
    %41 = sbr.rel (0) target = $region17
  $region16: #{block_forward.2} parent=0 // pred_region
    _
  $region17: #{block_forward.2} parent=0 // pred_fallthru
    _
  // Predicated region
  $region18: #{block_forward.2} parent=0 // pred_check
    _
  $region19: #{block_forward.2} parent=0 // pred_check_branch
    %43 = sbr.rel (0) target = $region21
  $region20: #{block_forward.2} parent=0 // pred_region
    _
  $region21: #{block_forward.2} parent=0 // pred_fallthru
    _

// kernel: block_forward.3
$region0: #{block_forward.3}
  #allocation0 [shape = 'u32[]', space=smem, size = 0x4, offset = 0x4, fixed_abs, tag = 'smem constant byte address 0x4 - core index']
  #allocation1 [shape = 'u32[72,128]{1,0:T(1,128)}', space=vmem, size = 0x9000, scoped, tag = 'internal scratch']
  %s0 = inlined_call_operand.vmem [shape: f32[16,32], index: 0, kind: input, shape index: {}]
  %s1 = inlined_call_operand.vmem [shape: f32[16,1], index: 1, kind: input, shape index: {}]
  %s2 = inlined_call_operand.vmem [shape: f32[16,16], index: 2, kind: input, shape index: {}]
  %s3 = inlined_call_operand.vmem [shape: f32[1,32], index: 3, kind: input, shape index: {}]
  %s4 = inlined_call_operand.vmem [shape: f32[1,32], index: 4, kind: input, shape index: {}]
  %s5 = inlined_call_operand.vmem [shape: f32[1,32], index: 5, kind: input, shape index: {}]
  %s6 = inlined_call_operand.vmem [shape: f32[1,32], index: 6, kind: input, shape index: {}]
  %s7 = inlined_call_operand.vmem [shape: bf16[32,128], index: 7, kind: input, shape index: {}]
  %s8 = inlined_call_operand.vmem [shape: f32[1,128], index: 8, kind: input, shape index: {}]
  %s9 = inlined_call_operand.vmem [shape: bf16[128,32], index: 9, kind: input, shape index: {}]
  %s10 = inlined_call_operand.vmem [shape: f32[1,32], index: 10, kind: input, shape index: {}]
  %s11 = inlined_call_operand.hbm [shape: f32[16,32], index: 11, kind: output, shape index: {}]
  %s12 = sld [smem:[#allocation0]]
  $region54: #{block_forward.3} parent=0
    _
  %s14 = ssub.s32 1, %s12
  %s15 = scalar_select 0, %s14, %s12
  $region1: #{block_forward.3} parent=0
    #allocation2 [shape = 'u8[8192]{0}', space=vmem, size = 0x2000, scoped, tag = 'output window, operand 0, single buffered']
    #allocation3 [shape = 's32[1]{0}', space=sflag, size = 0x4, scoped, tag = 'scoped memory for block_forward.3']
    %16 = vsyncpa [#allocation3], 0
    // Predicated region
    $region2: #{block_forward.3} parent=1 // pred_check
      _
    $region3: #{block_forward.3} parent=1 // pred_check_branch
      %18 = sbr.rel (0) target = $region5
    $region4: #{block_forward.3} parent=1 // pred_region
      _
    $region5: #{block_forward.3} parent=1 // pred_fallthru
      _
    // Predicated region
    $region6: #{block_forward.3} parent=1 // pred_check
      _
    $region7: #{block_forward.3} parent=1 // pred_check_branch
      %20 = sbr.rel (0) target = $region9
    $region8: #{block_forward.3} parent=1 // pred_region
      _
    $region9: #{block_forward.3} parent=1 // pred_fallthru
      _
    // Predicated region
    $region10: #{block_forward.3} parent=1 // pred_check
      _
    $region11: #{block_forward.3} parent=1 // pred_check_branch
      %22 = sbr.rel (0) target = $region13
    $region12: #{block_forward.3} parent=1 // pred_region
      _
    $region13: #{block_forward.3} parent=1 // pred_fallthru
      _
    // Predicated region
    $region14: #{block_forward.3} parent=1 // pred_check
      _
    $region15: #{block_forward.3} parent=1 // pred_check_branch
      %24 = sbr.rel (0) target = $region17
    $region16: #{block_forward.3} parent=1 // pred_region
      _
    $region17: #{block_forward.3} parent=1 // pred_fallthru
      _
    // Predicated region
    $region18: #{block_forward.3} parent=1 // pred_check
      _
    $region19: #{block_forward.3} parent=1 // pred_check_branch
      %26 = sbr.rel (0) target = $region21
    $region20: #{block_forward.3} parent=1 // pred_region
      _
    $region21: #{block_forward.3} parent=1 // pred_fallthru
      _
    // Predicated region
    $region22: #{block_forward.3} parent=1 // pred_check
      _
    $region23: #{block_forward.3} parent=1 // pred_check_branch
      %28 = sbr.rel (0) target = $region25
    $region24: #{block_forward.3} parent=1 // pred_region
      _
    $region25: #{block_forward.3} parent=1 // pred_fallthru
      _
    // Predicated region
    $region26: #{block_forward.3} parent=1 // pred_check
      _
    $region27: #{block_forward.3} parent=1 // pred_check_branch
      %30 = sbr.rel (0) target = $region29
    $region28: #{block_forward.3} parent=1 // pred_region
      _
    $region29: #{block_forward.3} parent=1 // pred_fallthru
      _
    // Predicated region
    $region30: #{block_forward.3} parent=1 // pred_check
      _
    $region31: #{block_forward.3} parent=1 // pred_check_branch
      %32 = sbr.rel (0) target = $region33
    $region32: #{block_forward.3} parent=1 // pred_region
      _
    $region33: #{block_forward.3} parent=1 // pred_fallthru
      _
    // Predicated region
    $region34: #{block_forward.3} parent=1 // pred_check
      _
    $region35: #{block_forward.3} parent=1 // pred_check_branch
      %34 = sbr.rel (0) target = $region37
    $region36: #{block_forward.3} parent=1 // pred_region
      _
    $region37: #{block_forward.3} parent=1 // pred_fallthru
      _
    // Predicated region
    $region38: #{block_forward.3} parent=1 // pred_check
      _
    $region39: #{block_forward.3} parent=1 // pred_check_branch
      %36 = sbr.rel (0) target = $region41
    $region40: #{block_forward.3} parent=1 // pred_region
      _
    $region41: #{block_forward.3} parent=1 // pred_fallthru
      _
    // Predicated region
    $region42: #{block_forward.3} parent=1 // pred_check
      _
    $region43: #{block_forward.3} parent=1 // pred_check_branch
      %38 = sbr.rel (0) target = $region45
    $region44: #{block_forward.3} parent=1 // pred_region
      _
    $region45: #{block_forward.3} parent=1 // pred_fallthru
      _
    %v40 = vld [vmem:[%s0] sm:$0xff]
    %v41 = vld [vmem:[%s0 + $0x8] sm:$0xff]
    %vm42 = vcmask 261120
    %v43 = vsel %vm42, %v40, 0.0
    %44 = vadd.xlane.f32.xlu0 %v43
    %v45 = vpop.xlane.xlu0 %44
    %v46 = vsel %vm42, %v41, 0.0
    %47 = vadd.xlane.f32.xlu0 %v46
    %v48 = vpop.xlane.xlu0 %47
    %v49 = vrcp.pop 32.0
    %v50 = vmul.f32 32.0, %v49
    %v51 = vsub.f32 1.0, %v50
    %v52 = vmul.f32 %v49, %v51
    %v53 = vadd.f32 %v49, %v52
    %vm54 = vweird.f32 %v49
    %v55 = vsel %vm54, %v49, %v53
    %v56 = vmul.f32 %v45, %v55
    %v57 = vmul.f32 %v48, %v55
    %v58 = vsub.f32 %v40, %v56
    %v59 = vsub.f32 %v41, %v57
    %v60 = vmul.f32 %v58, %v58
    %v61 = vmul.f32 %v59, %v59
    %v62 = vsel %vm42, %v60, 0.0
    %63 = vadd.xlane.f32.xlu0 %v62
    %v64 = vpop.xlane.xlu0 %63
    %v65 = vsel %vm42, %v61, 0.0
    %66 = vadd.xlane.f32.xlu0 %v65
    %v67 = vpop.xlane.xlu0 %66
    %v68 = vmul.f32 %v64, %v55
    %v69 = vmul.f32 %v67, %v55
    %v70 = vadd.f32 %v68, 1e-05
    %v71 = vadd.f32 %v69, 1e-05
    %v72 = vrsqrt.pop %v70
    %v73 = vmul.f32 %v72, %v70
    %v74 = vmul.f32 %v73, %v72
    %v75 = vmul.f32 0.5, %v74
    %v76 = vsub.f32 1.5, %v75
    %v77 = vmul.f32 %v72, %v76
    %vm78 = vweird.f32 %v70
    %vm79 = vweird.f32 %v72
    %vm80 = vmor %vm78, %vm79
    %v81 = vsel %vm80, %v72, %v77
    %v82 = vrsqrt.pop %v71
    %v83 = vmul.f32 %v82, %v71
    %v84 = vmul.f32 %v83, %v82
    %v85 = vmul.f32 0.5, %v84
    %v86 = vsub.f32 1.5, %v85
    %v87 = vmul.f32 %v82, %v86
    %vm88 = vweird.f32 %v71
    %vm89 = vweird.f32 %v82
    %vm90 = vmor %vm88, %vm89
    %v91 = vsel %vm90, %v82, %v87
    %v92 = vmul.f32 %v58, %v81
    %v93 = vmul.f32 %v59, %v91
    %v94 = vld [vmem:[%s3] sm:$0x1]
    %v96 = vperm.slane %v94, 0
    %v98 = vmul.f32 %v92, %v96
    %v99 = vmul.f32 %v93, %v96
    %v100 = vld [vmem:[%s4] sm:$0x1]
    %v102 = vperm.slane %v100, 0
    %v104 = vadd.f32 %v98, %v102
    %v105 = vadd.f32 %v99, %v102
    %v106 = vld [vmem:[%s2] sm:$0xff]
    %v107 = vld [vmem:[%s2 + $0x8] sm:$0xff]
    %vm108 = vcmask 130048
    %v110 = vsel %vm108, %v106, 0
    %v113 = vsel %vm108, %v107, 0
    %115 = vmatpush.msra.mxu0 0.0
    %116 = vmatpush.msra.mxu0 0.0
    %117 = vmatpush.msra.mxu0 0.0
    %118 = vmatpush.msra.mxu0 0.0
    %119 = vmatpush.msra.mxu0 0.0
    %120 = vmatpush.msra.mxu0 0.0
    %121 = vmatpush.msra.mxu0 0.0
    %122 = vmatpush.msra.mxu0 0.0
    %123 = vmatpush.msra.mxu0 0.0
    %124 = vmatpush.msra.mxu0 0.0
    %125 = vmatpush.msra.mxu0 0.0
    %126 = vmatpush.msra.mxu0 0.0
    %127 = vmatpush.msra.mxu0 0.0
    %128 = vmatpush.msra.mxu0 0.0
    %129 = vmatpush.msra.mxu0 %v105
    %130 = vmatpush.msra.mxu0 %v104
    %131 = vmatmul.f32.gmra.mxu0 %v110
    %v132 = vpop.f32.mrf.mxu0
    %v133 = vadd.f32 0.0, %v132
    %134 = vmatmul.f32.gmra.mxu0 %v113
    %v135 = vpop.f32.mrf.mxu0
    %v136 = vadd.f32 0.0, %v135
    %137 = vdwg.mxu0
    %v138 = vld [vmem:[%s1] sm:$0xff]
    %v139 = vld [vmem:[%s1 + $0x8] sm:$0xff]
    %141 = vset.pattern.permute.xlu0 0
    %142 = vperm.xlu0 %141, %v138
    %v143 = vpop.permute.xlu0 %142
    %146 = vset.pattern.permute.xlu0 0
    %147 = vperm.xlu0 %146, %v139
    %v148 = vpop.permute.xlu0 %147
    %v150 = vmul.f32 %v143, %v133
    %v151 = vmul.f32 %v148, %v136
    %v152 = vadd.f32 %v40, %v150
    %v153 = vadd.f32 %v41, %v151
    %v154 = vsel %vm42, %v152, 0.0
    %155 = vadd.xlane.f32.xlu0 %v154
    %v156 = vpop.xlane.xlu0 %155
    %v157 = vsel %vm42, %v153, 0.0
    %158 = vadd.xlane.f32.xlu0 %v157
    %v159 = vpop.xlane.xlu0 %158
    %v160 = vmul.f32 %v156, %v55
    %v161 = vmul.f32 %v159, %v55
    %v162 = vsub.f32 %v152, %v160
    %v163 = vsub.f32 %v153, %v161
    %v164 = vmul.f32 %v162, %v162
    %v165 = vmul.f32 %v163, %v163
    %v166 = vsel %vm42, %v164, 0.0
    %167 = vadd.xlane.f32.xlu0 %v166
    %v168 = vpop.xlane.xlu0 %167
    %v169 = vsel %vm42, %v165, 0.0
    %170 = vadd.xlane.f32.xlu0 %v169
    %v171 = vpop.xlane.xlu0 %170
    %v172 = vmul.f32 %v168, %v55
    %v173 = vmul.f32 %v171, %v55
    %v174 = vadd.f32 %v172, 1e-05
    %v175 = vadd.f32 %v173, 1e-05
    %v176 = vrsqrt.pop %v174
    %v177 = vmul.f32 %v176, %v174
    %v178 = vmul.f32 %v177, %v176
    %v179 = vmul.f32 0.5, %v178
    %v180 = vsub.f32 1.5, %v179
    %v181 = vmul.f32 %v176, %v180
    %vm182 = vweird.f32 %v174
    %vm183 = vweird.f32 %v176
    %vm184 = vmor %vm182, %vm183
    %v185 = vsel %vm184, %v176, %v181
    %v186 = vrsqrt.pop %v175
    %v187 = vmul.f32 %v186, %v175
    %v188 = vmul.f32 %v187, %v186
    %v189 = vmul.f32 0.5, %v188
    %v190 = vsub.f32 1.5, %v189
    %v191 = vmul.f32 %v186, %v190
    %vm192 = vweird.f32 %v175
    %vm193 = vweird.f32 %v186
    %vm194 = vmor %vm192, %vm193
    %v195 = vsel %vm194, %v186, %v191
    %v196 = vmul.f32 %v162, %v185
    %v197 = vmul.f32 %v163, %v195
    %v198 = vld [vmem:[%s5] sm:$0x1]
    %v200 = vperm.slane %v198, 0
    %v202 = vmul.f32 %v196, %v200
    %v203 = vmul.f32 %v197, %v200
    %v204 = vld [vmem:[%s6] sm:$0x1]
    %v206 = vperm.slane %v204, 0
    %v208 = vadd.f32 %v202, %v206
    %v209 = vadd.f32 %v203, %v206
    %v210 = vpack.c.bf16 %v209, %v208
    %v211 = vld [vmem:[%s7] sm:$0xf]
    %v212 = vld [vmem:[%s7 + $0x4] sm:$0xf]
    %v213 = vld [vmem:[%s7 + $0x8] sm:$0xf]
    %v214 = vld [vmem:[%s7 + $0xc] sm:$0xf]
    %v215 = vld [vmem:[%s8] sm:$0x1]
    %v217 = vperm.slane %v215, 0
    %v223 = vunpack.c.l.b16 %v211
    %v224 = vunpack.c.l.b16 %v212
    %v225 = vunpack.c.l.b16 %v213
    %v226 = vunpack.c.l.b16 %v214
    %v227 = vpack.c.b16 %v224, %v223
    %v228 = vpack.c.b16 %v226, %v225
    %v232 = vsel %vm42, %v210, 0
    %234 = vmatpush.bf16.msra.mxu0 0
    %235 = vmatpush.bf16.msra.mxu0 0
    %236 = vmatpush.bf16.msra.mxu0 0
    %237 = vmatpush.bf16.msra.mxu0 0
    %238 = vmatpush.bf16.msra.mxu0 0
    %239 = vmatpush.bf16.msra.mxu0 0
    %240 = vmatpush.bf16.msra.mxu0 %v228
    %241 = vmatpush.bf16.msra.mxu0 %v227
    %242 = vmatmul.bf16.gmra.mxu0 %v232
    %v243 = vpop.f32.mrf.mxu0
    %v244 = vadd.f32 %v217, %v243
    %v245 = vpop.f32.mrf.mxu0
    %v246 = vadd.f32 %v217, %v245
    %247 = vdwg.mxu0
    %v248 = vmul.f32 %v244, 0.5
    %v249 = vmul.f32 %v246, 0.5
    %v250 = vmul.f32 %v244, %v244
    %v251 = vmul.f32 %v246, %v246
    %v252 = vmul.f32 %v250, %v244
    %v253 = vmul.f32 %v251, %v246
    %v254 = vmul.f32 %v252, 0.044715
    %v255 = vmul.f32 %v253, 0.044715
    %v256 = vadd.f32 %v244, %v254
    %v257 = vadd.f32 %v246, %v255
    %v258 = vmul.f32 %v256, 0.7978846
    %v259 = vmul.f32 %v257, 0.7978846
    %v260 = vtanh.pop %v258
    %v261 = vtanh.pop %v259
    %v262 = vadd.f32 %v260, 1.0
    %v263 = vadd.f32 %v261, 1.0
    %v264 = vmul.f32 %v248, %v262
    %v265 = vmul.f32 %v249, %v263
    %v266 = vpack.c.bf16 %v265, %v264
    %v267 = vld [vmem:[%s9] sm:$0xf]
    %v268 = vld [vmem:[%s9 + $0x4] sm:$0xf]
    %v269 = vld [vmem:[%s9 + $0x8] sm:$0xf]
    %v270 = vld [vmem:[%s9 + $0xc] sm:$0xf]
    %v271 = vld [vmem:[%s9 + $0x10] sm:$0xf]
    %v272 = vld [vmem:[%s9 + $0x14] sm:$0xf]
    %v273 = vld [vmem:[%s9 + $0x18] sm:$0xf]
    %v274 = vld [vmem:[%s9 + $0x1c] sm:$0xf]
    %v275 = vld [vmem:[%s9 + $0x20] sm:$0xf]
    %v276 = vld [vmem:[%s9 + $0x24] sm:$0xf]
    %v277 = vld [vmem:[%s9 + $0x28] sm:$0xf]
    %v278 = vld [vmem:[%s9 + $0x2c] sm:$0xf]
    %v279 = vld [vmem:[%s9 + $0x30] sm:$0xf]
    %v280 = vld [vmem:[%s9 + $0x34] sm:$0xf]
    %v281 = vld [vmem:[%s9 + $0x38] sm:$0xf]
    %v282 = vld [vmem:[%s9 + $0x3c] sm:$0xf]
    %v283 = vld [vmem:[%s10] sm:$0x1]
    %v285 = vperm.slane %v283, 0
    %v303 = vunpack.c.l.b16 %v267
    %v304 = vunpack.c.l.b16 %v268
    %v305 = vunpack.c.l.b16 %v269
    %v306 = vunpack.c.l.b16 %v270
    %v307 = vunpack.c.l.b16 %v271
    %v308 = vunpack.c.l.b16 %v272
    %v309 = vunpack.c.l.b16 %v273
    %v310 = vunpack.c.l.b16 %v274
    %v311 = vunpack.c.l.b16 %v275
    %v312 = vunpack.c.l.b16 %v276
    %v313 = vunpack.c.l.b16 %v277
    %v314 = vunpack.c.l.b16 %v278
    %v315 = vunpack.c.l.b16 %v279
    %v316 = vunpack.c.l.b16 %v280
    %v317 = vunpack.c.l.b16 %v281
    %v318 = vunpack.c.l.b16 %v282
    %v319 = vpack.c.b16 %v304, %v303
    %v320 = vpack.c.b16 %v306, %v305
    %v321 = vpack.c.b16 %v308, %v307
    %v322 = vpack.c.b16 %v310, %v309
    %v323 = vpack.c.b16 %v312, %v311
    %v324 = vpack.c.b16 %v314, %v313
    %v325 = vpack.c.b16 %v316, %v315
    %v326 = vpack.c.b16 %v318, %v317
    %335 = vmatpush.bf16.msra.mxu0 %v326
    %336 = vmatpush.bf16.msra.mxu0 %v325
    %337 = vmatpush.bf16.msra.mxu0 %v324
    %338 = vmatpush.bf16.msra.mxu0 %v323
    %339 = vmatpush.bf16.msra.mxu0 %v322
    %340 = vmatpush.bf16.msra.mxu0 %v321
    %341 = vmatpush.bf16.msra.mxu0 %v320
    %342 = vmatpush.bf16.msra.mxu0 %v319
    %343 = vmatmul.bf16.gmra.mxu0 %v266
    %v344 = vpop.f32.mrf.mxu0
    %v345 = vadd.f32 %v285, %v344
    %v346 = vpop.f32.mrf.mxu0
    %v347 = vadd.f32 %v285, %v346
    %348 = vdwg.mxu0
    %v349 = vadd.f32 %v152, %v345
    %v350 = vadd.f32 %v153, %v347
    %351 = vst.msk [vmem:[#allocation2] sm:$0xff] %vm42, %v349
    %352 = vst.msk [vmem:[#allocation2 + $0x8] sm:$0xff] %vm42, %v350
    // Predicated region
    $region46: #{block_forward.3} parent=1 // pred_check
      _
    $region47: #{block_forward.3} parent=1 // pred_check_branch
      %354 = sbr.rel (0) target = $region49
    $region48: #{block_forward.3} parent=1 // pred_region
      %356 = vsyncadd [#allocation3], 0
      %s357 = sshll.u32 [#allocation2], 4
      %s358 = int_to_ptr.vmem [resolvable:$true] %s357
      %s359 = sshll.u32 %s11, 4
      %s360 = int_to_ptr.hbm [resolvable:$true] %s359
      %365 = dma.vmem_to_hbm [thread:$0]  %s358, 256, %s360, [#allocation3], 128, 128, 8
    $region49: #{block_forward.3} parent=1 // pred_fallthru
      _
    // Predicated region
    $region50: #{block_forward.3} parent=1 // pred_check
      _
    $region51: #{block_forward.3} parent=1 // pred_check_branch
      %367 = sbr.rel (0) target = $region53
    $region52: #{block_forward.3} parent=1 // pred_region
      %369 = dma.done [#allocation3], 256
    $region53: #{block_forward.3} parent=1 // pred_fallthru
      _
    %370 = vsyncpa [#allocation3], 1

</llo_original>
